<compile_context>
chip_gen: v5e
topology: v5e:2x2
jax: 0.10.0
libtpu: 0.0.40
codegen_flags: <defaults>
</compile_context>

<pallas_src>
import jax
import jax.numpy as jnp
from jax.experimental import pallas as pl
from jax.experimental.pallas import tpu as pltpu


def _vmem_capacity_bytes() -> int:
    try:
        return int(pltpu.get_tpu_info().vmem_capacity_bytes)
    except Exception:
        return 128 << 20  # v5e/v6e physical VMEM; conservative fallback


def _int_pow(x, p: int):
    """x**p for small positive int p via exponentiation-by-squaring (VALU only)."""
    result = None
    base = x
    while p > 0:
        if p & 1:
            result = base if result is None else result * base
        p >>= 1
        if p:
            base = base * base
    return result


def _make_normalize_kernel(power):
    """Kernel for one (B_n, C, TILE_HW) block; channel reduction is local."""

    def kernel(x_ref, o_ref):
        # NOTE(correctness guard): remainder blocks (batch or spatial) contain
        # uninitialized padded rows/lanes.  All math below is independent per
        # (batch, spatial) column and Pallas discards out-of-bounds writes, so
        # the padding is harmless.  Do NOT add cross-lane / cross-batch
        # reductions to this kernel without masking the padded region.
        x = x_ref[...].astype(jnp.float32)              # (B_n, C, TILE_HW)

        if power == 2:
            s = jnp.sum(x * x, axis=1, keepdims=True)
            norm = jnp.sqrt(s)
        elif isinstance(power, int) and 1 <= power <= 16:
            # Integer powers on the 4-wide VALU (hidden under HBM traffic);
            # jnp.power only on the reduced array for the final root.
            s = jnp.sum(_int_pow(x, power), axis=1, keepdims=True)
            norm = s if power == 1 else jnp.power(s, 1.0 / power)
        else:
            # General fallback (same NaN behavior as PyTorch for odd p / neg sums).
            s = jnp.sum(jnp.power(x, float(power)), axis=1, keepdims=True)
            norm = jnp.power(s, 1.0 / power)

        # Epsilon added AFTER the root, exactly like the PyTorch module.
        # One reciprocal per reduced column, then one multiply per element.
        inv = pl.reciprocal(norm + 1e-7, approx=False)  # (B_n, 1, TILE_HW)
        o_ref[...] = (x * inv).astype(o_ref.dtype)

    return kernel


def _block_plan(N, C, HW, itemsize, target_bytes):
    """Pick (B_n, tile_hw) so one block is ~target_bytes and lane-dense."""
    c_pad = -(-C // 8) * 8                 # f32 sublane padding of the channel dim
    bytes_per_col = c_pad * itemsize       # one padded (C,) column

    # Spatial tile: full axis if it fits the byte target, else a 128-multiple.
    if HW * bytes_per_col <= target_bytes:
        tile_hw = HW
    else:
        cap = max(128, (target_bytes // bytes_per_col) // 128 * 128)
        tile_hw = cap
        if HW % 128 == 0:                  # prefer an exact divisor (no padded tail)
            for t in range(cap, 127, -128):
                if HW % t == 0:
                    tile_hw = t
                    break

    # Fold batch images into the block when whole images are small.
    b_n = 1
    if tile_hw == HW:
        per_image = max(1, HW * bytes_per_col)
        b_n = max(1, min(N, target_bytes // per_image))
        while b_n > 1 and N % b_n != 0:    # prefer a divisor of N (no padded tail)
            b_n -= 1

    # Guarantee >= 2 grid steps so both v7x TensorCores get work.
    if pl.cdiv(N, b_n) * pl.cdiv(HW, tile_hw) < 2:
        if N >= 2:
            b_n = -(-N // 2)               # -> 2 batch steps
        elif tile_hw == HW and HW >= 256:
            half = max(128, ((-(-HW // 2) + 127) // 128) * 128)
            if half < HW:
                tile_hw = half             # -> 2 spatial steps
        # else: input is tiny; a single block is fine.

    return b_n, tile_hw, c_pad


def normalize(x: jax.Array, power=2) -> jax.Array:
    """Channel-wise Lp normalization matching the PyTorch Normalize module.

    x: (N, C, H, W) array (NCHW, same as PyTorch).
    """
    N, C, H, W = x.shape
    HW = H * W
    itemsize = jnp.dtype(x.dtype).itemsize
    x3 = x.reshape(N, C, HW)

    vmem_cap = _vmem_capacity_bytes()
    # v7x (64 MiB VMEM, ~3.2 TB/s HBM): bigger blocks amortize per-step
    # overhead better; ~2 MiB already reaches ~85% of roofline on v5e/v6e.
    target_bytes = (4 << 20) if vmem_cap <= (64 << 20) else (2 << 20)

    b_n, tile_hw, c_pad = _block_plan(N, C, HW, itemsize, target_bytes)
    grid = (pl.cdiv(N, b_n), pl.cdiv(HW, tile_hw))

    block_bytes = b_n * c_pad * tile_hw * itemsize
    # in + out, double-buffered, plus headroom; v5e's default scoped VMEM is
    # only 16 MiB, so raise it explicitly (stays well under physical VMEM).
    vmem_limit = min(int(0.75 * vmem_cap),
                     max(32 << 20, int(4 * block_bytes * 1.5)))

    cost = pl.CostEstimate(
        flops=3 * N * C * HW,
        transcendentals=2 * N * HW,
        bytes_accessed=2 * N * C * HW * itemsize,
    )

    out3 = pl.pallas_call(
        _make_normalize_kernel(power),
        out_shape=jax.ShapeDtypeStruct((N, C, HW), x.dtype),
        grid=grid,
        in_specs=[pl.BlockSpec((b_n, C, tile_hw), lambda n, s: (n, 0, s))],
        out_specs=pl.BlockSpec((b_n, C, tile_hw), lambda n, s: (n, 0, s)),
        compiler_params=pltpu.CompilerParams(
            # Channel reduction is inside the block, so both grid axes are
            # independent -> shard across megacore / v7x's 2 TensorCores.
            dimension_semantics=("parallel", "parallel"),
            vmem_limit_bytes=vmem_limit,
        ),
        cost_estimate=cost,
    )(x3)

    return out3.reshape(N, C, H, W)


def _reference_normalize(x: jax.Array, power=2) -> jax.Array:
    norm = jnp.power(
        jnp.sum(jnp.power(x, power), axis=1, keepdims=True), 1.0 / power
    )
    return x / (norm + 1e-7)


if __name__ == "__main__":
    key = jax.random.PRNGKey(0)

    # Primary test: shape consistent with the module's typical use.
    x = jax.random.normal(key, (2, 4, 16, 16), dtype=jnp.float32)
    out = jax.block_until_ready(normalize(x, power=2))
    ref = _reference_normalize(x, power=2)
    assert out.shape == x.shape and out.dtype == x.dtype
    assert jnp.allclose(out, ref, atol=1e-5, rtol=1e-5)

    k1, k2, k3 = jax.random.split(key, 3)

    # Non-multiple-of-128 spatial size (single full-axis block path).
    x2 = jax.random.normal(k1, (1, 3, 7, 9), dtype=jnp.float32)
    out2 = jax.block_until_ready(normalize(x2, power=2))
    assert jnp.allclose(out2, _reference_normalize(x2, power=2), atol=1e-5, rtol=1e-5)

    # General integer power path (positive inputs to mirror PyTorch's NaN-free case).
    x3 = jnp.abs(jax.random.normal(k2, (2, 4, 8, 8), dtype=jnp.float32)) + 0.1
    out3 = jax.block_until_ready(normalize(x3, power=3))
    assert jnp.allclose(out3, _reference_normalize(x3, power=3), atol=1e-5, rtol=1e-5)

    # Batch=1, larger spatial: exercises the forced >=2-step spatial split.
    x4 = jax.random.normal(k3, (1, 8, 64, 64), dtype=jnp.float32)
    out4 = jax.block_until_ready(normalize(x4, power=2))
    assert jnp.allclose(out4, _reference_normalize(x4, power=2), atol=1e-5, rtol=1e-5)

    print("KERNEL_OK")
</pallas_src>

<mosaic_0001>
module attributes {stable_mosaic.version = 11 : i64} {
  func.func @kernel(%arg0: i32, %arg1: i32, %arg2: memref<1x4x256xf32, #tpu.memory_space<vmem>>, %arg3: memref<1x4x256xf32, #tpu.memory_space<vmem>>) attributes {dimension_semantics = [#tpu.dimension_semantics<parallel>, #tpu.dimension_semantics<parallel>], iteration_bounds = array<i64: 2, 1>, scalar_prefetch = 0 : i64, scratch_operands = 0 : i64, tpu.core_type = #tpu.core_type<tc>, window_params = [{transform_indices = @transform_0, window_bounds = array<i64: 1, 4, 256>}, {transform_indices = @transform_1, window_bounds = array<i64: 1, 4, 256>}]} {
    %c0 = arith.constant 0 : index
    %c0_0 = arith.constant 0 : index
    %c0_1 = arith.constant 0 : index
    %0 = vector.load %arg2[%c0, %c0_0, %c0_1] : memref<1x4x256xf32, #tpu.memory_space<vmem>>, vector<1x4x256xf32>
    %1 = arith.mulf %0, %0 : vector<1x4x256xf32>
    %cst = arith.constant dense<0.000000e+00> : vector<1x256xf32>
    %2 = vector.multi_reduction <add>, %1, %cst [1] : vector<1x4x256xf32> to vector<1x256xf32>
    %3 = vector.shape_cast %2 : vector<1x256xf32> to vector<1x1x256xf32>
    %4 = math.sqrt %3 : vector<1x1x256xf32>
    %cst_2 = arith.constant 1.000000e-07 : f32
    %5 = vector.broadcast %cst_2 : f32 to vector<1x1x256xf32>
    %6 = arith.addf %4, %5 : vector<1x1x256xf32>
    %7 = tpu.reciprocal %6 : vector<1x1x256xf32> -> vector<1x1x256xf32>
    %8 = vector.broadcast %7 : vector<1x1x256xf32> to vector<1x4x256xf32>
    %9 = arith.mulf %0, %8 : vector<1x4x256xf32>
    %c0_3 = arith.constant 0 : index
    %c0_4 = arith.constant 0 : index
    %c0_5 = arith.constant 0 : index
    %10 = vector.load %arg3[%c0_3, %c0_4, %c0_5] : memref<1x4x256xf32, #tpu.memory_space<vmem>>, vector<1x4x256xf32>
    tpu.vector_store %arg3[%c0_3, %c0_4, %c0_5], %9 {strides = array<i32>} : memref<1x4x256xf32, #tpu.memory_space<vmem>>, vector<1x4x256xf32>,
    return
  }
  func.func @transform_0(%arg0: i32, %arg1: i32) -> (i32, i32, i32) {
    %c0_i32 = arith.constant 0 : i32
    %c0_i32_0 = arith.constant 0 : i32
    return %arg0, %c0_i32, %arg1 : i32, i32, i32
  }
  func.func @transform_1(%arg0: i32, %arg1: i32) -> (i32, i32, i32) {
    %c0_i32 = arith.constant 0 : i32
    %c0_i32_0 = arith.constant 0 : i32
    return %arg0, %c0_i32, %arg1 : i32, i32, i32
  }
}

</mosaic_0001>

<llo_original>
// kernel: tpu_custom_call.1
$region0: #{tpu_custom_call.1}
  #allocation0 [shape = 'u32[]', space=smem, size = 0x4, offset = 0x4, fixed_abs, tag = 'smem constant byte address 0x4 - core index']
  #allocation1 [shape = 'u32[72,128]{1,0:T(1,128)}', space=vmem, size = 0x9000, scoped, tag = 'internal scratch']
  %s0 = inlined_call_operand.hbm [shape: f32[2,4,256], index: 0, kind: input, shape index: {}]
  %s1 = inlined_call_operand.hbm [shape: f32[2,4,256], index: 1, kind: output, shape index: {}]
  %s2 = sld [smem:[#allocation0]]
  $region41: #{tpu_custom_call.1} parent=0
    _
  %s4 = ssub.s32 1, %s2
  %s5 = scalar_select 0, %s4, %s2
  $region1: #{tpu_custom_call.1} parent=0
    #allocation2 [shape = 'u8[8192]{0}', space=vmem, size = 0x2000, scoped, tag = 'input window, operand 0']
    #allocation3 [shape = 's32[2]{0}', space=sflag, size = 0x8, scoped, tag = 'scoped memory for tpu_custom_call.1']
    #allocation4 [shape = 's32[2]{0}', space=sflag, size = 0x8, scoped, tag = 'scoped memory for tpu_custom_call.1']
    #allocation5 [shape = 'u8[8192]{0}', space=vmem, size = 0x2000, scoped, tag = 'output window, operand 0']
    %6 = vsyncpa [#allocation3], 0
    %s7 = scalar_lea.sflag [#allocation3], 1
    %8 = vsyncpa %s7, 0
    %9 = vsyncpa [#allocation4], 0
    %s10 = scalar_lea.sflag [#allocation4], 1
    %11 = vsyncpa %s10, 0
    loop: start=0, step=1, limit=4
    $region2: #{tpu_custom_call.1} parent=1 // loop_pre_header
      _
    $region3: #{tpu_custom_call.1} parent=1 // loop_header
      %s13 = sphi 0, %s17
      %p14 = scmp.ge.s32.totalorder %s13, 4
      %s20 = sphi 0, %s32
      %s21 = sphi 0, %s28
      %s22 = sphi 0, %s20
      %s23 = sphi 0, %s21
      %s24 = sphi 0, %s22
      %s25 = sphi 0, %s23
      %s37 = sphi 0, %s39
      %s40 = sphi 0, %s37
      %s41 = sphi 0, %s40
      %s57 = sphi 0, %s41
      %s65 = sphi 0, %s67
      %s68 = sphi 0, %s65
      %s69 = sphi 0, %s68
      %s85 = sphi 0, %s69
    $region4: #{tpu_custom_call.1} parent=1 // loop_header_branch
      %16 = sbr.rel (%p14) target = $region8
    $region5: #{tpu_custom_call.1} parent=1 // loop_body
      %s18 = ssub.s32 %s13, 1
      %s19 = ssub.s32 %s13, 2
      %s26 = sadd.s32 1, %s21
      %p27 = scmp.ge.s32.totalorder %s26, 1
      %s28 = scalar_select %p27, 0, %s26
      %s29 = sadd.s32 1, %s20
      %s30 = scalar_select %p27, %s29, %s20
      %p31 = scmp.ge.s32.totalorder %s30, 2
      %s32 = scalar_select %p31, 0, %s30
      %s33 = ssub.s32 %s20, %s32
      %s34 = ssub.s32 %s21, %s28
      %s35 = sor.u32 %s33, %s34
      %p36 = scmp.eq.s32.totalorder %s35, 0
      %s38 = sadd.s32 %s37, 1
      %s39 = scalar_select %p36, %s37, %s38
      %p42 = pneg %p36
      %p43 = scmp.eq.s32.totalorder %s13, 1
      %p44 = por %p42, %p43
      %p45 = scmp.ne.s32.totalorder %s37, %s40
      %p46 = scmp.eq.s32.totalorder %s13, 0
      %p47 = por %p45, %p46
      %p48 = scmp.ne.s32.totalorder %s37, %s40
      %p49 = scmp.eq.s32.totalorder %s18, 1
      %p50 = por %p48, %p49
      %p51 = scmp.ne.s32.totalorder %s40, %s41
      %p52 = scmp.eq.s32.totalorder %s18, 0
      %p53 = por %p51, %p52
      %p54 = scmp.ne.s32.totalorder %s40, %s41
      %p55 = scmp.eq.s32.totalorder %s19, 1
      %p56 = por %p54, %p55
      %p58 = scmp.ne.s32.totalorder %s41, %s57
      %p59 = scmp.eq.s32.totalorder %s19, 0
      %p60 = por %p58, %p59
      %s61 = ssub.s32 %s20, %s32
      %s62 = ssub.s32 %s21, %s28
      %s63 = sor.u32 %s61, %s62
      %p64 = scmp.eq.s32.totalorder %s63, 0
      %s66 = sadd.s32 %s65, 1
      %s67 = scalar_select %p64, %s65, %s66
      %p70 = pneg %p64
      %p71 = scmp.eq.s32.totalorder %s13, 1
      %p72 = por %p70, %p71
      %p73 = scmp.ne.s32.totalorder %s65, %s68
      %p74 = scmp.eq.s32.totalorder %s13, 0
      %p75 = por %p73, %p74
      %p76 = scmp.ne.s32.totalorder %s65, %s68
      %p77 = scmp.eq.s32.totalorder %s18, 1
      %p78 = por %p76, %p77
      %p79 = scmp.ne.s32.totalorder %s68, %s69
      %p80 = scmp.eq.s32.totalorder %s18, 0
      %p81 = por %p79, %p80
      %p82 = scmp.ne.s32.totalorder %s68, %s69
      %p83 = scmp.eq.s32.totalorder %s19, 1
      %p84 = por %p82, %p83
      %p86 = scmp.ne.s32.totalorder %s69, %s85
      %p87 = scmp.eq.s32.totalorder %s19, 0
      %p88 = por %p86, %p87
      %p89 = scmp.le.s32.totalorder 1, %s13
      %p90 = scmp.lt.s32.totalorder %s13, 3
      %p91 = pnand %p89, %p90
      %p92 = pneg %p91
      // Predicated region
      $region9: #{tpu_custom_call.1} parent=5 // pred_check
        _
      $region10: #{tpu_custom_call.1} parent=5 // pred_check_branch
        %94 = sbr.rel (%p91) target = $region12
      $region11: #{tpu_custom_call.1} parent=5 // pred_region
        %s95 = ssub.s32 %s13, 1
      $region12: #{tpu_custom_call.1} parent=5 // pred_fallthru
        _
      %p96 = scmp.lt.s32.totalorder %s13, 2
      // Predicated region
      $region13: #{tpu_custom_call.1} parent=5 // pred_check
        %p97 = pneg %p96
      $region14: #{tpu_custom_call.1} parent=5 // pred_check_branch
        %99 = sbr.rel (%p97) target = $region16
      $region15: #{tpu_custom_call.1} parent=5 // pred_region
        // Predicated region
        $region17: #{tpu_custom_call.1} parent=15 // pred_check
          %p100 = pneg %p47
        $region18: #{tpu_custom_call.1} parent=15 // pred_check_branch
          %102 = sbr.rel (%p100) target = $region20
        $region19: #{tpu_custom_call.1} parent=15 // pred_region
          %s103 = sand.u32 %s37, 1
          %s104 = scalar_lea.sflag [#allocation3], %s103
          %s105 = sand.u32 %s37, 1
          %s106 = smul.addr %s105, 8
          %s107 = scalar_lea.vmem [#allocation2], %s106
          %s108 = smul.u32 2, %s21
          %110 = vsyncadd %s104, 0
          %s111 = smul.addr %s20, 2
          %s112 = sadd.s32 %s108, %s111
          %s113 = smul.addr %s112, 4
          %s114 = scalar_lea.hbm %s0, %s113
          %s116 = sshll.u32 %s114, 4
          %s117 = int_to_ptr.hbm [resolvable:$true] %s116
          %s118 = sshll.u32 %s107, 4
          %s119 = int_to_ptr.vmem [resolvable:$true] %s118
          %121 = dma.hbm_to_vmem [thread:$0]  %s117, 128, %s119, %s104
        $region20: #{tpu_custom_call.1} parent=15 // pred_fallthru
          _
      $region16: #{tpu_custom_call.1} parent=5 // pred_fallthru
        _
      %p122 = scmp.le.s32.totalorder 1, %s13
      %p123 = scmp.lt.s32.totalorder %s13, 3
      %p124 = pnand %p122, %p123
      %p125 = pneg %p124
      // Predicated region
      $region21: #{tpu_custom_call.1} parent=5 // pred_check
        _
      $region22: #{tpu_custom_call.1} parent=5 // pred_check_branch
        %127 = sbr.rel (%p124) target = $region24
      $region23: #{tpu_custom_call.1} parent=5 // pred_region
        %s128 = ssub.s32 %s13, 1
        %s129 = sand.u32 %s40, 1
        %s130 = scalar_lea.sflag [#allocation3], %s129
        %s131 = sand.u32 %s40, 1
        %s132 = smul.addr %s131, 8
        %s133 = scalar_lea.vmem [#allocation2], %s132
        // Predicated region
        $region25: #{tpu_custom_call.1} parent=23 // pred_check
          %p134 = pneg %p53
        $region26: #{tpu_custom_call.1} parent=23 // pred_check_branch
          %136 = sbr.rel (%p134) target = $region28
        $region27: #{tpu_custom_call.1} parent=23 // pred_region
          %138 = dma.done %s130, 128
        $region28: #{tpu_custom_call.1} parent=23 // pred_fallthru
          _
        %s139 = sand.u32 %s40, 1
        %s140 = scalar_lea.sflag [#allocation3], %s139
        %s141 = sand.u32 %s40, 1
        %s142 = smul.addr %s141, 8
        %s143 = scalar_lea.vmem [#allocation2], %s142
        %p144 = pneg %p53
        %p145 = pneg %p50
        %p146 = pneg %p81
        %p147 = pneg %p78
        %s148 = sand.u32 %s68, 1
        %s149 = scalar_lea.sflag [#allocation4], %s148
        %s150 = sand.u32 %s68, 1
        %s151 = smul.addr %s150, 8
        %s152 = scalar_lea.vmem [#allocation5], %s151
        %s153 = smul.u32 2, %s23
        %s154 = smul.u32 2, %s23
        %v155 = vld [vmem:[%s133] sm:$0xff]
        %v156 = vmul.f32 %v155, %v155
        %158 = vst [vmem:[#allocation1] ss:$2 sm:$0xff] %v156
        %v159 = vld.sshfl [vmem:[#allocation1] sm:$0xff pattern:$0x75316420]
        %v160 = vld.sshfl [vmem:[#allocation1 + $0x8] sm:$0xff pattern:$0x75316420]
        %vm163 = vcmask 1043456
        %v164 = vsel %vm163, %v159, 0.0
        %v165 = vrot.slane %v164, 4
        %v166 = vadd.f32 %v164, %v165
        %v167 = vrot.slane %v166, 2
        %v168 = vadd.f32 %v166, %v167
        %v169 = vrot.slane %v168, 1
        %v170 = vadd.f32 %v168, %v169
        %v171 = vsel %vm163, %v160, 0.0
        %v172 = vrot.slane %v171, 4
        %v173 = vadd.f32 %v171, %v172
        %v174 = vrot.slane %v173, 2
        %v175 = vadd.f32 %v173, %v174
        %v176 = vrot.slane %v175, 1
        %v177 = vadd.f32 %v175, %v176
        %v178 = vrsqrt.pop %v170
        %v179 = vmul.f32 %v178, %v170
        %v180 = vmul.f32 %v179, %v178
        %v181 = vmul.f32 0.5, %v180
        %v182 = vsub.f32 1.5, %v181
        %v183 = vmul.f32 %v178, %v182
        %v184 = vmul.f32 %v170, %v183
        %vm185 = vcmp.eq.f32.partialorder %v170, inf
        %v186 = vsel %vm185, %v170, %v184
        %vm187 = vcmp.eq.f32.partialorder %v170, 0.0
        %v188 = vand.u32 %v170, 2147483648
        %v189 = vsel %vm187, %v188, %v186
        %v190 = vrsqrt.pop %v177
        %v191 = vmul.f32 %v190, %v177
        %v192 = vmul.f32 %v191, %v190
        %v193 = vmul.f32 0.5, %v192
        %v194 = vsub.f32 1.5, %v193
        %v195 = vmul.f32 %v190, %v194
        %v196 = vmul.f32 %v177, %v195
        %vm197 = vcmp.eq.f32.partialorder %v177, inf
        %v198 = vsel %vm197, %v177, %v196
        %vm199 = vcmp.eq.f32.partialorder %v177, 0.0
        %v200 = vand.u32 %v177, 2147483648
        %v201 = vsel %vm199, %v200, %v198
        %v202 = vadd.f32 %v189, 1e-07
        %v203 = vadd.f32 %v201, 1e-07
        %v204 = vrcp.pop %v202
        %v205 = vmul.f32 %v202, %v204
        %v206 = vsub.f32 1.0, %v205
        %v207 = vmul.f32 %v204, %v206
        %v208 = vadd.f32 %v204, %v207
        %vm209 = vweird.f32 %v202
        %vm210 = vweird.f32 %v204
        %vm211 = vmor %vm209, %vm210
        %v212 = vsel %vm211, %v204, %v208
        %v213 = vand.u32 2147483647, %v202
        %vm214 = vcmp.eq.f32.partialorder %v213, 8.507059e+37
        %v215 = vand.u32 %v202, 2147483648
        %v216 = vor.u32 1.1754944e-38, %v215
        %v217 = vsel %vm214, %v216, %v212
        %v218 = vrcp.pop %v203
        %v219 = vmul.f32 %v203, %v218
        %v220 = vsub.f32 1.0, %v219
        %v221 = vmul.f32 %v218, %v220
        %v222 = vadd.f32 %v218, %v221
        %vm223 = vweird.f32 %v203
        %vm224 = vweird.f32 %v218
        %vm225 = vmor %vm223, %vm224
        %v226 = vsel %vm225, %v218, %v222
        %v227 = vand.u32 2147483647, %v203
        %vm228 = vcmp.eq.f32.partialorder %v227, 8.507059e+37
        %v229 = vand.u32 %v203, 2147483648
        %v230 = vor.u32 1.1754944e-38, %v229
        %v231 = vsel %vm228, %v230, %v226
        %v234 = vrot.slane %v231, 4
        %v235 = vsel %vm163, %v217, %v234
        %v237 = vmul.f32 %v155, %v235
        %238 = vst [vmem:[%s152] sm:$0xff] %v237
        %s239 = sand.u32 %s68, 1
        %s240 = scalar_lea.sflag [#allocation4], %s239
        %s241 = sand.u32 %s68, 1
        %s242 = smul.addr %s241, 8
        %s243 = scalar_lea.vmem [#allocation5], %s242
        // Predicated region
        $region29: #{tpu_custom_call.1} parent=23 // pred_check
          %p244 = pneg %p78
        $region30: #{tpu_custom_call.1} parent=23 // pred_check_branch
          %246 = sbr.rel (%p244) target = $region32
        $region31: #{tpu_custom_call.1} parent=23 // pred_region
          %s247 = smul.u32 2, %s23
          %249 = vsyncadd %s240, 0
          %s250 = smul.addr %s22, 2
          %s251 = sadd.s32 %s247, %s250
          %s252 = smul.addr %s251, 4
          %s253 = scalar_lea.hbm %s1, %s252
          %s255 = sshll.u32 %s243, 4
          %s256 = int_to_ptr.vmem [resolvable:$true] %s255
          %s257 = sshll.u32 %s253, 4
          %s258 = int_to_ptr.hbm [resolvable:$true] %s257
          %260 = dma.vmem_to_hbm [thread:$0]  %s256, 128, %s258, %s240
        $region32: #{tpu_custom_call.1} parent=23 // pred_fallthru
          _
      $region24: #{tpu_custom_call.1} parent=5 // pred_fallthru
        _
      %p261 = scmp.le.s32.totalorder 2, %s13
      // Predicated region
      $region33: #{tpu_custom_call.1} parent=5 // pred_check
        %p262 = pneg %p261
      $region34: #{tpu_custom_call.1} parent=5 // pred_check_branch
        %264 = sbr.rel (%p262) target = $region36
      $region35: #{tpu_custom_call.1} parent=5 // pred_region
        %s265 = ssub.s32 %s13, 2
        // Predicated region
        $region37: #{tpu_custom_call.1} parent=35 // pred_check
          %p266 = pneg %p84
        $region38: #{tpu_custom_call.1} parent=35 // pred_check_branch
          %268 = sbr.rel (%p266) target = $region40
        $region39: #{tpu_custom_call.1} parent=35 // pred_region
          %s269 = sand.u32 %s69, 1
          %s270 = scalar_lea.sflag [#allocation4], %s269
          %s271 = sand.u32 %s69, 1
          %s272 = smul.addr %s271, 8
          %s273 = scalar_lea.vmem [#allocation5], %s272
          %275 = dma.done %s270, 128
        $region40: #{tpu_custom_call.1} parent=35 // pred_fallthru
          _
      $region36: #{tpu_custom_call.1} parent=5 // pred_fallthru
        _
    $region6: #{tpu_custom_call.1} parent=1 // loop_footer
      %s17 = sadd.s32 1, %s13
    $region7: #{tpu_custom_call.1} parent=1 // loop_footer_branch
      %12 = sbr.rel target = $region3
    $region8: #{tpu_custom_call.1} parent=1 // loop_exit
      _
    %276 = vsyncpa [#allocation3], 1
    %s277 = scalar_lea.sflag [#allocation3], 1
    %278 = vsyncpa %s277, 1
    %279 = vsyncpa [#allocation4], 1
    %s280 = scalar_lea.sflag [#allocation4], 1
    %281 = vsyncpa %s280, 1

</llo_original>
